<compile_context>
chip_gen: v7x
topology: tpu7x:2x2x1
jax: 0.10.0
libtpu: 0.0.40
codegen_flags: <defaults>
</compile_context>

<pallas_src>
import math

import jax
import jax.numpy as jnp
from jax import lax
from jax.experimental import pallas as pl
from jax.experimental.pallas import tpu as pltpu


def _round_up(a: int, b: int) -> int:
    return ((a + b - 1) // b) * b


# ---------------------------------------------------------------------------
# Kernels
# ---------------------------------------------------------------------------
def _xnor_matmul_kernel(xb_ref, wb_ref, s_ref, o_ref):
    """Full-K matmul of pre-binarized operands: (tm, K) x (N, K) -> (tm, N)."""
    y = lax.dot_general(
        xb_ref[...], wb_ref[...],
        dimension_numbers=(((1,), (1,)), ((), ())),   # contract K of both
        preferred_element_type=jnp.float32)
    o_ref[...] = (y * s_ref[...]).astype(o_ref.dtype)


def _xnor_matmul_kernel_tiled(xb_ref, wb_ref, s_ref, o_ref):
    """(i, j, k) tile; accumulate directly into the VMEM-resident out block."""
    k = pl.program_id(2)
    y = lax.dot_general(
        xb_ref[...], wb_ref[...],
        dimension_numbers=(((1,), (1,)), ((), ())),
        preferred_element_type=jnp.float32)

    @pl.when(k == 0)
    def _():                      # first K-chunk: write (no zero + add)
        o_ref[...] = y

    @pl.when(k > 0)
    def _():                      # later K-chunks: accumulate in place (f32)
        o_ref[...] = o_ref[...] + y

    @pl.when(k == pl.num_programs(2) - 1)
    def _():                      # finalize: apply per-output-channel scale
        o_ref[...] = o_ref[...] * s_ref[...]


# ---------------------------------------------------------------------------
# Tile pickers (bound padding waste to ~12.5%)
# ---------------------------------------------------------------------------
def _pick_row_tile(Bp8: int, tm_req: int) -> int:
    """8-aligned row tile <= tm_req with small padding overhead."""
    tm_req = int(max(8, min(tm_req, 1024)))
    if Bp8 <= tm_req:
        return Bp8
    for cand in (1024, 512, 384, 256, 192, 128, 96, 64, 32, 16, 8):
        if cand > tm_req:
            continue
        pad = _round_up(Bp8, cand) - Bp8
        if pad * 8 <= Bp8:
            return cand
    return 8


def _pick_lane_tile(ext128: int, t_req: int) -> int:
    """128-aligned lane-dim tile <= t_req with small padding overhead."""
    t_req = int(max(128, min(t_req, 1024)))
    if ext128 <= t_req:
        return ext128
    for cand in (1024, 768, 512, 384, 256, 128):
        if cand > t_req:
            continue
        pad = _round_up(ext128, cand) - ext128
        if pad * 8 <= ext128:
            return cand
    return 128


# ---------------------------------------------------------------------------
# Wrapper
# ---------------------------------------------------------------------------
def xnor_binlinear(x, weight, scale, *, tm=512, tn=512, tk=1024, path="auto"):
    """y = (sign(x) @ sign(weight)^T) * scale.

    x: (B, K), weight: (N, K), scale: (1, N)  ->  (B, N) float32.
    path: "auto" | "single" | "rows" | "tiled".
    """
    B, K = x.shape
    N, K2 = weight.shape
    assert K == K2 and scale.shape == (1, N)

    # Pre-binarize both operands once, outside the kernel.
    xb = jnp.sign(x).astype(jnp.bfloat16)
    wb = jnp.sign(weight).astype(jnp.bfloat16)
    scale = scale.astype(jnp.float32)

    Bp8 = _round_up(max(B, 8), 8)
    Kp = _round_up(K, 128)
    Np = _round_up(N, 128)

    # Rough VMEM footprints (bytes): bf16 x/W, f32 scale/out.
    whole_bytes = 2 * Bp8 * Kp + 2 * Np * Kp + 4 * Np + 4 * Bp8 * Np
    w_bytes = 2 * Np * Kp

    if path == "auto":
        if whole_bytes <= (6 << 20):
            path = "single"
        elif w_bytes <= (6 << 20):
            path = "rows"
        else:
            path = "tiled"

    # ---------------- whole-problem-in-VMEM path (no grid) ------------------
    if path == "single":
        xp = jnp.pad(xb, ((0, Bp8 - B), (0, Kp - K)))
        wp = jnp.pad(wb, ((0, Np - N), (0, Kp - K)))
        sp = jnp.pad(scale, ((0, 0), (0, Np - N)))
        out = pl.pallas_call(
            _xnor_matmul_kernel,
            out_shape=jax.ShapeDtypeStruct((Bp8, Np), jnp.float32),
            in_specs=[
                pl.BlockSpec(memory_space=pltpu.MemorySpace.VMEM),
                pl.BlockSpec(memory_space=pltpu.MemorySpace.VMEM),
                pl.BlockSpec(memory_space=pltpu.MemorySpace.VMEM),
            ],
            out_specs=pl.BlockSpec(memory_space=pltpu.MemorySpace.VMEM),
        )(xp, wp, sp)
        return out[:B, :N]

    # ---------------- W-resident path: grid over row blocks only ------------
    if path == "rows":
        tm_r = _pick_row_tile(Bp8, tm)

        def rows_bytes(t):
            # resident W + scale, double-buffered bf16 x tile, double-buffered f32 out tile
            return w_bytes + 4 * Np + 2 * (2 * t * Kp) + 2 * (4 * t * Np)

        while tm_r > 8 and rows_bytes(tm_r) > (12 << 20):
            tm_r = max(8, tm_r // 2)

        Bp = _round_up(Bp8, tm_r)
        xp = jnp.pad(xb, ((0, Bp - B), (0, Kp - K)))
        wp = jnp.pad(wb, ((0, Np - N), (0, Kp - K)))
        sp = jnp.pad(scale, ((0, 0), (0, Np - N)))

        out = pl.pallas_call(
            _xnor_matmul_kernel,
            out_shape=jax.ShapeDtypeStruct((Bp, Np), jnp.float32),
            grid_spec=pltpu.PrefetchScalarGridSpec(
                num_scalar_prefetch=0,
                grid=(Bp // tm_r,),
                in_specs=[
                    pl.BlockSpec((tm_r, Kp), lambda i: (i, 0)),
                    pl.BlockSpec((Np, Kp), lambda i: (0, 0)),   # DMA once, resident
                    pl.BlockSpec((1, Np), lambda i: (0, 0)),    # resident
                ],
                out_specs=pl.BlockSpec((tm_r, Np), lambda i: (i, 0)),
            ),
            compiler_params=pltpu.CompilerParams(
                dimension_semantics=("parallel",)),
        )(xp, wp, sp)
        return out[:B, :N]

    # ---------------- fully tiled (i, j, k) path -----------------------------
    tm_t = _pick_row_tile(Bp8, tm)
    tn_t = _pick_lane_tile(Np, tn)
    tk_t = _pick_lane_tile(Kp, tk)

    # v7x has 2 TensorCores: keep >= 2 blocks on some parallel axis.
    if Bp8 <= tm_t and Np > 128:
        n_blocks = Np // 128
        tn_t = min(tn_t, 128 * max(1, n_blocks // 2))

    def tiled_bytes(tmm, tnn, tkk):
        # double-buffered bf16 x/W tiles + double-buffered f32 out tile + scale
        return 2 * (2 * tmm * tkk) + 2 * (2 * tnn * tkk) + 2 * (4 * tmm * tnn) + 2 * 4 * tnn

    while tiled_bytes(tm_t, tn_t, tk_t) > (12 << 20) and tk_t > 128:
        tk_t = max(128, tk_t // 2)
    while tiled_bytes(tm_t, tn_t, tk_t) > (12 << 20) and tn_t > 128:
        tn_t = max(128, tn_t // 2)
    while tiled_bytes(tm_t, tn_t, tk_t) > (12 << 20) and tm_t > 8:
        tm_t = max(8, tm_t // 2)

    Bp = _round_up(Bp8, tm_t)
    Npp = _round_up(Np, tn_t)
    Kpp = _round_up(Kp, tk_t)

    xp = jnp.pad(xb, ((0, Bp - B), (0, Kpp - K)))
    wp = jnp.pad(wb, ((0, Npp - N), (0, Kpp - K)))
    sp = jnp.pad(scale, ((0, 0), (0, Npp - N)))

    grid = (Bp // tm_t, Npp // tn_t, Kpp // tk_t)
    out = pl.pallas_call(
        _xnor_matmul_kernel_tiled,
        out_shape=jax.ShapeDtypeStruct((Bp, Npp), jnp.float32),
        grid_spec=pltpu.PrefetchScalarGridSpec(
            num_scalar_prefetch=0,
            grid=grid,
            in_specs=[
                pl.BlockSpec((tm_t, tk_t), lambda i, j, k: (i, k)),
                pl.BlockSpec((tn_t, tk_t), lambda i, j, k: (j, k)),
                pl.BlockSpec((1, tn_t), lambda i, j, k: (0, j)),
            ],
            out_specs=pl.BlockSpec((tm_t, tn_t), lambda i, j, k: (i, j)),
        ),
        compiler_params=pltpu.CompilerParams(
            dimension_semantics=("parallel", "parallel", "arbitrary")),
    )(xp, wp, sp)
    return out[:B, :N]


# ---------------------------------------------------------------------------
# Test
# ---------------------------------------------------------------------------
if __name__ == "__main__":
    key = jax.random.PRNGKey(0)
    k_x, k_w, k_s = jax.random.split(key, 3)

    batch, in_features, out_features = 8, 64, 48

    # Deterministic stand-in for kaiming_uniform_(a=sqrt(5)): bound = 1/sqrt(fan_in).
    w_bound = 1.0 / math.sqrt(in_features)
    s_bound = 1.0 / math.sqrt(out_features)
    weight = jax.random.uniform(
        k_w, (out_features, in_features), jnp.float32, -w_bound, w_bound)
    scale = jax.random.uniform(
        k_s, (1, out_features), jnp.float32, -s_bound, s_bound)
    x = jax.random.normal(k_x, (batch, in_features), jnp.float32)

    # 1) Small-shape (no-grid) path.
    y = jax.block_until_ready(xnor_binlinear(x, weight, scale))
    y_ref = (jnp.sign(x) @ jnp.sign(weight).T) * scale
    assert y.shape == (batch, out_features)
    assert jnp.allclose(y, y_ref, atol=1e-5), "single-path mismatch vs reference"

    # 2) W-resident row-streaming path (forced), multiple row blocks.
    B2, K2, N2 = 512, 256, 192
    k_x2, k_w2, k_s2 = jax.random.split(jax.random.PRNGKey(1), 3)
    x2 = jax.random.normal(k_x2, (B2, K2), jnp.float32)
    w2 = jax.random.normal(k_w2, (N2, K2), jnp.float32) * 0.01
    s2 = jax.random.uniform(k_s2, (1, N2), jnp.float32)
    y2 = jax.block_until_ready(
        xnor_binlinear(x2, w2, s2, path="rows", tm=128))
    y2_ref = (jnp.sign(x2) @ jnp.sign(w2).T) * s2
    assert y2.shape == (B2, N2)
    assert jnp.allclose(y2, y2_ref, atol=1e-4), "rows-path mismatch vs reference"

    # 3) Fully tiled path (forced), non-aligned shapes, multiple k blocks.
    B3, K3, N3 = 200, 300, 260
    k_x3, k_w3, k_s3 = jax.random.split(jax.random.PRNGKey(2), 3)
    x3 = jax.random.normal(k_x3, (B3, K3), jnp.float32)
    w3 = jax.random.normal(k_w3, (N3, K3), jnp.float32) * 0.01
    s3 = jax.random.uniform(k_s3, (1, N3), jnp.float32)
    y3 = jax.block_until_ready(
        xnor_binlinear(x3, w3, s3, path="tiled", tn=128, tk=128))
    y3_ref = (jnp.sign(x3) @ jnp.sign(w3).T) * s3
    assert y3.shape == (B3, N3)
    assert jnp.allclose(y3, y3_ref, atol=1e-4), "tiled-path mismatch vs reference"

    print("KERNEL_OK")
</pallas_src>

<mosaic_0001>
module attributes {stable_mosaic.version = 11 : i64} {
  func.func @_xnor_matmul_kernel(%arg0: memref<8x128xbf16, #tpu.memory_space<vmem>>, %arg1: memref<128x128xbf16, #tpu.memory_space<vmem>>, %arg2: memref<1x128xf32, #tpu.memory_space<vmem>>, %arg3: memref<8x128xf32, #tpu.memory_space<vmem>>) attributes {dimension_semantics = [], scalar_prefetch = 0 : i64, scratch_operands = 0 : i64, tpu.core_type = #tpu.core_type<tc>} {
    %c0 = arith.constant 0 : index
    %c0_0 = arith.constant 0 : index
    %0 = vector.load %arg0[%c0, %c0_0] : memref<8x128xbf16, #tpu.memory_space<vmem>>, vector<8x128xbf16>
    %c0_1 = arith.constant 0 : index
    %c0_2 = arith.constant 0 : index
    %1 = vector.load %arg1[%c0_1, %c0_2] : memref<128x128xbf16, #tpu.memory_space<vmem>>, vector<128x128xbf16>
    %cst = arith.constant dense<0.000000e+00> : vector<8x128xf32>
    %2 = tpu.matmul %0, %1, %cst {dimension_numbers = #tpu.dot_dimension_numbers<[1], [1], [0], [0], [0, 0, 1, 0], [], []>} : vector<8x128xbf16>, vector<128x128xbf16>, vector<8x128xf32> -> vector<8x128xf32>
    %c0_3 = arith.constant 0 : index
    %c0_4 = arith.constant 0 : index
    %3 = vector.load %arg2[%c0_3, %c0_4] : memref<1x128xf32, #tpu.memory_space<vmem>>, vector<1x128xf32>
    %4 = vector.broadcast %3 : vector<1x128xf32> to vector<8x128xf32>
    %5 = arith.mulf %2, %4 : vector<8x128xf32>
    %c0_5 = arith.constant 0 : index
    %c0_6 = arith.constant 0 : index
    %6 = vector.load %arg3[%c0_5, %c0_6] : memref<8x128xf32, #tpu.memory_space<vmem>>, vector<8x128xf32>
    tpu.vector_store %arg3[%c0_5, %c0_6], %5 {strides = array<i32>} : memref<8x128xf32, #tpu.memory_space<vmem>>, vector<8x128xf32>,
    return
  }
}

</mosaic_0001>

<llo_original>
// kernel: tpu_custom_call.1
$region0: #{tpu_custom_call.1}
  #allocation0 [shape = 'u32[]', space=smem, size = 0x4, offset = 0x4, fixed_abs, tag = 'smem constant byte address 0x4 - core index']
  #allocation1 [shape = 'u32[144,128]{1,0:T(1,128)}', space=vmem, size = 0x12000, scoped, tag = 'internal scratch']
  %s0 = inlined_call_operand.hbm [shape: bf16[8,128], index: 0, kind: input, shape index: {}]
  %s1 = inlined_call_operand.hbm [shape: bf16[128,128], index: 1, kind: input, shape index: {}]
  %s2 = inlined_call_operand.vmem [shape: f32[1,128], index: 2, kind: input, shape index: {}]
  %s3 = inlined_call_operand.hbm [shape: f32[8,128], index: 3, kind: output, shape index: {}]
  %s4 = sld [smem:[#allocation0]]
  $region30: #{tpu_custom_call.1} parent=0
    _
  %s6 = ssub.s32 1, %s4
  %s7 = scalar_select 0, %s6, %s4
  $region1: #{tpu_custom_call.1} parent=0
    #allocation2 [shape = 'u8[2048]{0}', space=vmem, size = 0x800, scoped, tag = 'input window, operand 0, single buffered']
    #allocation3 [shape = 's32[1]{0}', space=sflag, size = 0x4, scoped, tag = 'scoped memory for tpu_custom_call.1']
    #allocation4 [shape = 's32[1]{0}', space=sflag, size = 0x4, scoped, tag = 'scoped memory for tpu_custom_call.1']
    #allocation5 [shape = 'u8[32768]{0}', space=vmem, size = 0x8000, scoped, tag = 'input window, operand 1, single buffered']
    #allocation6 [shape = 's32[1]{0}', space=sflag, size = 0x4, scoped, tag = 'scoped memory for tpu_custom_call.1']
    #allocation7 [shape = 'u8[4096]{0}', space=vmem, size = 0x1000, scoped, tag = 'output window, operand 0, single buffered']
    %8 = vsyncpa [#allocation3], 0
    %9 = vsyncpa [#allocation6], 0
    %10 = vsyncpa [#allocation4], 0
    // Predicated region
    $region2: #{tpu_custom_call.1} parent=1 // pred_check
      _
    $region3: #{tpu_custom_call.1} parent=1 // pred_check_branch
      %12 = sbr.rel (0) target = $region5
    $region4: #{tpu_custom_call.1} parent=1 // pred_region
      %s14 = ssub.s32 64, 64
      %15 = vsyncadd [#allocation3], %s14
      %s17 = sshll.u32 [#allocation2], 4
      %s18 = int_to_ptr.vmem [resolvable:$true] %s17
      %20 = dma.hbm_to_vmem [thread:$0]  %s0, 64, %s18, [#allocation3]
    $region5: #{tpu_custom_call.1} parent=1 // pred_fallthru
      _
    // Predicated region
    $region6: #{tpu_custom_call.1} parent=1 // pred_check
      _
    $region7: #{tpu_custom_call.1} parent=1 // pred_check_branch
      %22 = sbr.rel (0) target = $region9
    $region8: #{tpu_custom_call.1} parent=1 // pred_region
      %s24 = ssub.s32 1024, 1024
      %25 = vsyncadd [#allocation6], %s24
      %s26 = sshll.u32 [#allocation5], 4
      %s27 = int_to_ptr.vmem [resolvable:$true] %s26
      %32 = dma.hbm_to_vmem [thread:$0]  %s1, 1024, %s27, [#allocation6], 64, 64, 4
    $region9: #{tpu_custom_call.1} parent=1 // pred_fallthru
      _
    // Predicated region
    $region10: #{tpu_custom_call.1} parent=1 // pred_check
      _
    $region11: #{tpu_custom_call.1} parent=1 // pred_check_branch
      %34 = sbr.rel (0) target = $region13
    $region12: #{tpu_custom_call.1} parent=1 // pred_region
      _
    $region13: #{tpu_custom_call.1} parent=1 // pred_fallthru
      _
    // Predicated region
    $region14: #{tpu_custom_call.1} parent=1 // pred_check
      _
    $region15: #{tpu_custom_call.1} parent=1 // pred_check_branch
      %36 = sbr.rel (0) target = $region17
    $region16: #{tpu_custom_call.1} parent=1 // pred_region
      %37 = dma.done [#allocation3], 64
    $region17: #{tpu_custom_call.1} parent=1 // pred_fallthru
      _
    // Predicated region
    $region18: #{tpu_custom_call.1} parent=1 // pred_check
      _
    $region19: #{tpu_custom_call.1} parent=1 // pred_check_branch
      %39 = sbr.rel (0) target = $region21
    $region20: #{tpu_custom_call.1} parent=1 // pred_region
      %40 = dma.done [#allocation6], 1024
    $region21: #{tpu_custom_call.1} parent=1 // pred_fallthru
      _
    %v42 = vld [vmem:[#allocation2] sm:$0xf]
    %v43 = vld [vmem:[#allocation5] sm:$0xf]
    %v44 = vld [vmem:[#allocation5 + $0x4] sm:$0xf]
    %v45 = vld [vmem:[#allocation5 + $0x8] sm:$0xf]
    %v46 = vld [vmem:[#allocation5 + $0xc] sm:$0xf]
    %v47 = vld [vmem:[#allocation5 + $0x10] sm:$0xf]
    %v48 = vld [vmem:[#allocation5 + $0x14] sm:$0xf]
    %v49 = vld [vmem:[#allocation5 + $0x18] sm:$0xf]
    %v50 = vld [vmem:[#allocation5 + $0x1c] sm:$0xf]
    %v51 = vld [vmem:[#allocation5 + $0x20] sm:$0xf]
    %v52 = vld [vmem:[#allocation5 + $0x24] sm:$0xf]
    %v53 = vld [vmem:[#allocation5 + $0x28] sm:$0xf]
    %v54 = vld [vmem:[#allocation5 + $0x2c] sm:$0xf]
    %v55 = vld [vmem:[#allocation5 + $0x30] sm:$0xf]
    %v56 = vld [vmem:[#allocation5 + $0x34] sm:$0xf]
    %v57 = vld [vmem:[#allocation5 + $0x38] sm:$0xf]
    %v58 = vld [vmem:[#allocation5 + $0x3c] sm:$0xf]
    %v75 = vunpack.c.l.b16 %v43
    %v76 = vunpack.c.l.b16 %v44
    %v77 = vunpack.c.l.b16 %v45
    %v78 = vunpack.c.l.b16 %v46
    %v79 = vunpack.c.l.b16 %v47
    %v80 = vunpack.c.l.b16 %v48
    %v81 = vunpack.c.l.b16 %v49
    %v82 = vunpack.c.l.b16 %v50
    %v83 = vunpack.c.l.b16 %v51
    %v84 = vunpack.c.l.b16 %v52
    %v85 = vunpack.c.l.b16 %v53
    %v86 = vunpack.c.l.b16 %v54
    %v87 = vunpack.c.l.b16 %v55
    %v88 = vunpack.c.l.b16 %v56
    %v89 = vunpack.c.l.b16 %v57
    %v90 = vunpack.c.l.b16 %v58
    %v91 = vpack.c.b16 %v76, %v75
    %v92 = vpack.c.b16 %v78, %v77
    %v93 = vpack.c.b16 %v80, %v79
    %v94 = vpack.c.b16 %v82, %v81
    %v95 = vpack.c.b16 %v84, %v83
    %v96 = vpack.c.b16 %v86, %v85
    %v97 = vpack.c.b16 %v88, %v87
    %v98 = vpack.c.b16 %v90, %v89
    %107 = vmatprep.subr.bf16.mxu0 0
    %108 = vmatpush1.bf16.xpose.msra.mxu0 %v91
    %109 = vmatprep.subr.bf16.mxu0 0
    %110 = vmatpush1.bf16.xpose.msra.mxu0 %v92
    %111 = vmatprep.subr.bf16.mxu0 0
    %112 = vmatpush1.bf16.xpose.msra.mxu0 %v93
    %113 = vmatprep.subr.bf16.mxu0 0
    %114 = vmatpush1.bf16.xpose.msra.mxu0 %v94
    %115 = vmatprep.subr.bf16.mxu0 0
    %116 = vmatpush1.bf16.xpose.msra.mxu0 %v95
    %117 = vmatprep.subr.bf16.mxu0 0
    %118 = vmatpush1.bf16.xpose.msra.mxu0 %v96
    %119 = vmatprep.subr.bf16.mxu0 0
    %120 = vmatpush1.bf16.xpose.msra.mxu0 %v97
    %121 = vmatprep.subr.bf16.mxu0 0
    %122 = vmatpush1.bf16.xpose.msra.mxu0 %v98
    %123 = vmatprep.subr.bf16.mxu0 0
    %124 = vmatpush1.bf16.xpose.msra.mxu0 0
    %125 = vmatprep.subr.bf16.mxu0 0
    %126 = vmatpush1.bf16.xpose.msra.mxu0 0
    %127 = vmatprep.subr.bf16.mxu0 0
    %128 = vmatpush1.bf16.xpose.msra.mxu0 0
    %129 = vmatprep.subr.bf16.mxu0 0
    %130 = vmatpush1.bf16.xpose.msra.mxu0 0
    %131 = vmatprep.subr.bf16.mxu0 0
    %132 = vmatpush1.bf16.xpose.msra.mxu0 0
    %133 = vmatprep.subr.bf16.mxu0 0
    %134 = vmatpush1.bf16.xpose.msra.mxu0 0
    %135 = vmatprep.subr.bf16.mxu0 0
    %136 = vmatpush1.bf16.xpose.msra.mxu0 0
    %137 = vmatprep.subr.bf16.mxu0 0
    %138 = vmatpush1.bf16.xpose.msra.mxu0 0
    %139 = vmatprep.mubr.bf16.mxu0 0
    %140 = vmatmul.mubr.bf16.gmra.mrb[0].mxu0 %v42
    %v141 = vpop.f32.mrb[0].mxu0
    %v142 = vadd.f32 0.0, %v141
    %v143 = vpop.f32.mrb[0].mxu0
    %v144 = vpop.f32.mrb[0].mxu0
    %v145 = vpop.f32.mrb[0].mxu0
    %146 = vdwg.mxu0
    %v147 = vld [vmem:[%s2] sm:$0x1]
    %v149 = vlaneseq
    %v150 = vshrl.u32 %v149, 7
    %v151 = vsub.s32 0, %v150
    %v152 = vrot.slane %v147, %v151
    %v154 = vmul.f32 %v142, %v152
    %155 = vst [vmem:[#allocation7] sm:$0xff] %v154
    // Predicated region
    $region22: #{tpu_custom_call.1} parent=1 // pred_check
      _
    $region23: #{tpu_custom_call.1} parent=1 // pred_check_branch
      %157 = sbr.rel (0) target = $region25
    $region24: #{tpu_custom_call.1} parent=1 // pred_region
      %s159 = ssub.s32 128, 128
      %160 = vsyncadd [#allocation4], %s159
      %s162 = sshll.u32 [#allocation7], 4
      %s163 = int_to_ptr.vmem [resolvable:$true] %s162
      %165 = dma.vmem_to_hbm [thread:$0]  %s163, 128, %s3, [#allocation4]
    $region25: #{tpu_custom_call.1} parent=1 // pred_fallthru
      _
    // Predicated region
    $region26: #{tpu_custom_call.1} parent=1 // pred_check
      _
    $region27: #{tpu_custom_call.1} parent=1 // pred_check_branch
      %167 = sbr.rel (0) target = $region29
    $region28: #{tpu_custom_call.1} parent=1 // pred_region
      %168 = dma.done [#allocation4], 128
    $region29: #{tpu_custom_call.1} parent=1 // pred_fallthru
      _
    %169 = vsyncpa [#allocation3], 1
    %170 = vsyncpa [#allocation6], 1
    %171 = vsyncpa [#allocation4], 1

</llo_original>
